<compile_context>
chip_gen: v6e
topology: v6e:2x2x1
jax: 0.10.0
libtpu: 0.0.40
codegen_flags: <defaults>
</compile_context>

<pallas_src>
import functools

import numpy as np
import jax
import jax.numpy as jnp
from jax.experimental import pallas as pl
from jax.experimental.pallas import tpu as pltpu


# ----------------------------------------------------------------------------
# Helpers
# ----------------------------------------------------------------------------
def _round_up(n, m):
    return ((int(n) + m - 1) // m) * m


def _prod_over_rows(x):
    """Product over the sublane (first) dim of a (d, tm) tile -> (1, tm).

    Pairwise halving tree of full-width elementwise multiplies; odd leftovers
    are folded back in, so it works for any d >= 1 and never drops a feature.
    """
    while x.shape[0] > 1:
        d = x.shape[0]
        h = d // 2
        y = x[:h] * x[h:2 * h]
        if d % 2:
            if h == 1:
                y = y * x[2 * h:]
            else:
                y = jnp.concatenate([y[:1] * x[2 * h:], y[1:]], axis=0)
        x = y
    return x  # (1, tm)


# ----------------------------------------------------------------------------
# Pallas kernel
# ----------------------------------------------------------------------------
def nnb_forward_kernel(
    x_cat_ref,   # (tm, d_cat) int8  0/1 indicators, batch-major (HBM layout)
    x_cts_ref,   # (tm, d_cts) f32   raw continuous features, batch-major
    params_ref,  # (P, 1)      f32   [lifts | 1/std_std | -m/std_std | 1/sd | -mu/sd]
    out_ref,     # (1, tm)     f32   lane-dense per-sample output slab
    *,
    d_cat,
    d_cts,
    base_c,
    lower_lim,
    upper_lim,
):
    a_cat = _round_up(d_cat, 8)
    a_cts = _round_up(d_cts, 8)
    p = params_ref[...]
    lifts = p[0:d_cat]                                       # (d_cat, 1) pre-clamped
    o = a_cat
    inv_std_std = p[o:o + d_cts]
    b1 = p[o + a_cts:o + a_cts + d_cts]
    inv_sd = p[o + 2 * a_cts:o + 2 * a_cts + d_cts]
    b2 = p[o + 3 * a_cts:o + 3 * a_cts + d_cts]

    # ---------------- CatLayer.forward ----------------
    # x_cat is a 0/1 dummy-coded indicator (module casts cat data to bool) and
    # lifts are pre-clamped to [lower_lim, upper_lim] host-side, so
    #   x*lift, out[x==0]=1, clamp   ==   where(x == 0, 1, clipped_lift).
    # (Equivalence relies on x being strictly 0/1.)  int8 tile is widened in
    # register; the (tm, d) -> (d, tm) relayout runs on the XLU and is hidden
    # under the input DMA in this HBM-bound kernel.
    xc_t = x_cat_ref[...].astype(jnp.float32).T              # (d_cat, tm)
    cat_out = jnp.where(xc_t == 0.0, jnp.float32(1.0), lifts)
    cat_prod = _prod_over_rows(cat_out)                      # (1, tm)

    # ------------- StdLayer + CtsLayer (fused) -------------
    # xs = (x - std_mean)/std_std = x*inv_std_std + b1
    # z  = (xs - mu_c)/sd_c       = xs*inv_sd + b2
    # ratio = N(mu,sd).pdf(xs) / N(0,1).pdf(xs) = exp(0.5*(xs^2 - z^2)) * inv_sd
    xt = x_cts_ref[...].T                                     # (d_cts, tm)
    xs = xt * inv_std_std + b1
    z = xs * inv_sd + b2
    # TODO(synk): the fused form stays finite where the reference's 0/0 (both
    #             pdfs underflow, |xs| >~ 13 sigma) would give NaN -> upper_lim;
    #             identical for non-degenerate inputs.
    ratio = jnp.exp(jnp.float32(0.5) * (xs * xs - z * z)) * inv_sd

    cts_out = jnp.maximum(ratio, jnp.float32(lower_lim))      # NaN propagates (torch.max)
    bad = jnp.isnan(cts_out) | (cts_out == jnp.inf)           # nan_to_num(nan=U, posinf=U)
    cts_out = jnp.where(bad, jnp.float32(upper_lim), cts_out)
    cts_prod = _prod_over_rows(cts_out)                       # (1, tm)

    out_ref[...] = jnp.float32(base_c) * cts_prod * cat_prod


def nnb_forward(x_cat, x_cts, params, *, tm=8192):
    """Per-sample forward.

    x_cat: (B, d_cat) int8 (or any int) 0/1 indicators, x_cts: (B, d_cts) f32.
    Inputs are consumed in their natural batch-major HBM layout — no wrapper
    pad / transpose / dtype widening.  tm = samples per grid step (lane tile);
    8192 default, ~4096 suffices on v5e, 16384 recommended on v7x.  Small
    batches run as a single grid step (payload-gated, not step-count-gated).
    """
    B, d_cat = x_cat.shape
    bc, d_cts = x_cts.shape
    assert B == bc

    # tm multiple of 512: 128-lane output blocks + 32-sublane int8 input blocks.
    tm = max(512, min(_round_up(tm, 512), _round_up(B, 512)))
    n_steps = pl.cdiv(B, tm)
    b_pad = n_steps * tm   # only the tiny output is padded; inputs are not —
                           # edge blocks are handled by Pallas boundary masking.

    kernel = functools.partial(
        nnb_forward_kernel,
        d_cat=d_cat,
        d_cts=d_cts,
        base_c=float(params["base_c"]),
        lower_lim=float(params["lower_lim"]),
        upper_lim=float(params["upper_lim"]),
    )

    P = params["packed_col"].shape[0]
    out = pl.pallas_call(
        kernel,
        out_shape=jax.ShapeDtypeStruct((1, b_pad), jnp.float32),
        grid=(n_steps,),
        in_specs=[
            pl.BlockSpec((tm, d_cat), lambda i: (i, 0)),   # int8 cat tile
            pl.BlockSpec((tm, d_cts), lambda i: (i, 0)),   # f32 cts tile
            pl.BlockSpec((P, 1), lambda i: (0, 0)),        # packed params (tiny)
        ],
        out_specs=pl.BlockSpec((1, tm), lambda i: (0, i)),
        compiler_params=pltpu.CompilerParams(dimension_semantics=("parallel",)),
    )(x_cat, x_cts, params["packed_col"])
    return out[0, :B]


# ----------------------------------------------------------------------------
# Parameter fitting glue (mirrors col_means / col_stds / layer __init__ exactly)
# ----------------------------------------------------------------------------
def col_means_np(x, row_weights=None):
    x = x.astype(np.float32)
    if row_weights is not None:
        nz = np.nonzero(row_weights)[0]
        out = x[nz] * row_weights[nz].reshape(-1, 1)
        return out.sum(axis=0) / row_weights.sum()
    return x.mean(axis=0)


def col_stds_np(x, row_weights=None):
    x = x.astype(np.float32)
    if row_weights is not None:
        means = col_means_np(x, row_weights)
        nz = np.nonzero(row_weights)[0]
        out = (x[nz] - means) ** 2 * row_weights[nz].reshape(-1, 1)
        # NOTE: m = sum of nonzero row *indices*, mirroring the reference's
        #       `row_weights.nonzero().sum()` quirk exactly (intentional).
        m = nz.sum()
        return np.sqrt(out.sum(axis=0) / ((m - 1) / m * row_weights.sum()))
    return x.std(axis=0, ddof=1)  # torch.std default is unbiased


def fit_nnb_params(ly, lx_cat, lx_cts, lower_lim=0.01, upper_lim=100.0, c=1):
    y = ly.astype(np.float32)
    base = np.array([np.mean(1.0 - y), np.mean(y)], dtype=np.float32)

    # StdLayer
    std_mean = col_means_np(lx_cts).astype(np.float32)
    std_std = col_stds_np(lx_cts).astype(np.float32)
    x_cts_std = (lx_cts.astype(np.float32) - std_mean) / std_std

    # CtsLayer (fit on standardized data, per class via binary row weights)
    cts_means = np.stack(
        [col_means_np(x_cts_std, 1.0 - y), col_means_np(x_cts_std, y)], axis=0
    ).astype(np.float32)
    cts_stds = np.stack(
        [col_stds_np(x_cts_std, 1.0 - y), col_stds_np(x_cts_std, y)], axis=0
    ).astype(np.float32)

    # CatLayer (mask_ind = 0: lift masking is incompatible with continuous inputs)
    # TODO(synk): feature-selection masking (mask_ind=1) not implemented; it is
    #             mutually exclusive with continuous inputs in the reference.
    cat_lifts = np.maximum(
        np.stack([col_means_np(lx_cat, 1.0 - y), col_means_np(lx_cat, y)], axis=0)
        / col_means_np(lx_cat),
        lower_lim,
    ).astype(np.float32)

    d_cat, d_cts = lx_cat.shape[1], lx_cts.shape[1]
    a_cat, a_cts = _round_up(d_cat, 8), _round_up(d_cts, 8)

    # Single packed (P, 1) kernel param stream, 8-row-aligned segments:
    #   [clipped lifts | 1/std_std | -std_mean/std_std | 1/sd_c | -mu_c/sd_c]
    # Lifts are pre-clamped to [lower_lim, upper_lim]; equivalent to the
    # reference's "multiply then clamp" only because x_cat is strictly 0/1.
    packed = np.zeros((a_cat + 4 * a_cts, 1), np.float32)
    packed[0:d_cat, 0] = np.clip(cat_lifts[c], lower_lim, upper_lim)
    o = a_cat
    packed[o:o + d_cts, 0] = 1.0 / std_std
    packed[o + a_cts:o + a_cts + d_cts, 0] = -std_mean / std_std
    packed[o + 2 * a_cts:o + 2 * a_cts + d_cts, 0] = 1.0 / cts_stds[c]
    packed[o + 3 * a_cts:o + 3 * a_cts + d_cts, 0] = -cts_means[c] / cts_stds[c]

    return {
        "base_c": float(base[c]),
        "lower_lim": float(lower_lim),
        "upper_lim": float(upper_lim),
        # kernel-side packed params
        "packed_col": jnp.asarray(packed),
        # raw params kept for the unfused numpy reference check
        "cat_lifts_c": cat_lifts[c],
        "std_mean": std_mean,
        "std_std": std_std,
        "cts_mean_c": cts_means[c],
        "cts_std_c": cts_stds[c],
    }


# ----------------------------------------------------------------------------
# Pure-numpy reference of the torch forward (unfused, for correctness check)
# ----------------------------------------------------------------------------
def ref_forward_np(x_cat, x_cts, params):
    lo, hi = params["lower_lim"], params["upper_lim"]
    lifts = params["cat_lifts_c"]
    cat_out = x_cat * lifts
    cat_out = np.where(x_cat == 0.0, 1.0, cat_out)
    cat_out = np.clip(cat_out, lo, hi)
    cat_prod = np.prod(cat_out, axis=1)

    xs = (x_cts - params["std_mean"]) / params["std_std"]
    mu, sd = params["cts_mean_c"], params["cts_std_c"]
    inv_sqrt_2pi = 0.3989422804014327
    pdf = np.exp(-0.5 * ((xs - mu) / sd) ** 2) / sd * inv_sqrt_2pi
    std_pdf = np.exp(-0.5 * xs * xs) * inv_sqrt_2pi
    ratio = pdf / std_pdf
    cts_out = np.maximum(ratio, lo)
    cts_out = np.where(np.isnan(cts_out) | np.isposinf(cts_out), hi, cts_out)
    cts_prod = np.prod(cts_out, axis=1)

    return params["base_c"] * cts_prod * cat_prod


# ----------------------------------------------------------------------------
# Main
# ----------------------------------------------------------------------------
if __name__ == "__main__":
    N_TRAIN, D_CAT, D_CTS, B = 256, 16, 8, 512

    key = jax.random.PRNGKey(0)
    k1, k2, k3, k4, k5 = jax.random.split(key, 5)

    # Deterministic synthetic "training" data (parameter fitting, host-side).
    ly = np.asarray(jax.random.uniform(k1, (N_TRAIN,)) < 0.4, dtype=np.float32)
    lx_cat = np.asarray(jax.random.uniform(k2, (N_TRAIN, D_CAT)) < 0.5, dtype=np.float32)
    lx_cts = np.asarray(
        jax.random.normal(k3, (N_TRAIN, D_CTS)) * 2.0 + 1.0, dtype=np.float32
    )

    params = fit_nnb_params(ly, lx_cat, lx_cts, lower_lim=0.01, upper_lim=100.0, c=1)

    # Deterministic test batch: cat data stays int8 0/1 in HBM, cts stays f32.
    x_cat = (jax.random.uniform(k4, (B, D_CAT)) < 0.5).astype(jnp.int8)
    x_cts = (jax.random.normal(k5, (B, D_CTS)) * 2.0 + 1.0).astype(jnp.float32)

    out = nnb_forward(x_cat, x_cts, params)
    out = jax.block_until_ready(out)

    ref = ref_forward_np(np.asarray(x_cat, np.float32), np.asarray(x_cts, np.float32), params)
    np.testing.assert_allclose(np.asarray(out), ref.astype(np.float32), rtol=1e-3, atol=1e-6)

    print("KERNEL_OK")
</pallas_src>

<mosaic_0001>
module attributes {stable_mosaic.version = 11 : i64} {
  func.func @nnb_forward_kernel(%arg0: i32, %arg1: memref<512x16xi8, #tpu.memory_space<vmem>>, %arg2: memref<512x8xf32, #tpu.memory_space<vmem>>, %arg3: memref<48x1xf32, #tpu.memory_space<vmem>>, %arg4: memref<1x512xf32, #tpu.memory_space<vmem>>) attributes {dimension_semantics = [#tpu.dimension_semantics<parallel>], iteration_bounds = array<i64: 1>, scalar_prefetch = 0 : i64, scratch_operands = 0 : i64, tpu.core_type = #tpu.core_type<tc>, window_params = [{transform_indices = @transform_0, window_bounds = array<i64: 512, 16>}, {transform_indices = @transform_1, window_bounds = array<i64: 512, 8>}, {pipeline_mode = #tpu.pipeline_mode<synchronous>, transform_indices = @transform_2, window_bounds = array<i64: 48, 1>}, {transform_indices = @transform_3, window_bounds = array<i64: 1, 512>}]} {
    %c0 = arith.constant 0 : index
    %c0_0 = arith.constant 0 : index
    %0 = vector.load %arg3[%c0, %c0_0] : memref<48x1xf32, #tpu.memory_space<vmem>>, vector<48x1xf32>
    %1 = vector.extract_strided_slice %0 {offsets = [0, 0], sizes = [16, 1], strides = [1, 1]} : vector<48x1xf32> to vector<16x1xf32>
    %2 = vector.extract_strided_slice %0 {offsets = [16, 0], sizes = [8, 1], strides = [1, 1]} : vector<48x1xf32> to vector<8x1xf32>
    %3 = vector.extract_strided_slice %0 {offsets = [24, 0], sizes = [8, 1], strides = [1, 1]} : vector<48x1xf32> to vector<8x1xf32>
    %4 = vector.extract_strided_slice %0 {offsets = [32, 0], sizes = [8, 1], strides = [1, 1]} : vector<48x1xf32> to vector<8x1xf32>
    %5 = vector.extract_strided_slice %0 {offsets = [40, 0], sizes = [8, 1], strides = [1, 1]} : vector<48x1xf32> to vector<8x1xf32>
    %c0_1 = arith.constant 0 : index
    %c0_2 = arith.constant 0 : index
    %6 = vector.load %arg1[%c0_1, %c0_2] : memref<512x16xi8, #tpu.memory_space<vmem>>, vector<512x16xi8>
    %7 = arith.sitofp %6 : vector<512x16xi8> to vector<512x16xf32>
    %8 = tpu.transpose %7, [1, 0] : vector<512x16xf32> -> vector<16x512xf32>
    %cst = arith.constant 0.000000e+00 : f32
    %9 = vector.broadcast %cst : f32 to vector<16x512xf32>
    %10 = arith.cmpf oeq, %8, %9 : vector<16x512xf32>
    %cst_3 = arith.constant 1.000000e+00 : f32
    %11 = vector.broadcast %cst_3 : f32 to vector<16x512xf32>
    %12 = vector.shape_cast %1 : vector<16x1xf32> to vector<16x1xf32>
    %13 = vector.broadcast %12 : vector<16x1xf32> to vector<16x512xf32>
    %14 = arith.select %10, %11, %13 : vector<16x512xi1>, vector<16x512xf32>
    %15 = vector.extract_strided_slice %14 {offsets = [0, 0], sizes = [8, 512], strides = [1, 1]} : vector<16x512xf32> to vector<8x512xf32>
    %16 = vector.extract_strided_slice %14 {offsets = [8, 0], sizes = [8, 512], strides = [1, 1]} : vector<16x512xf32> to vector<8x512xf32>
    %17 = arith.mulf %15, %16 : vector<8x512xf32>
    %18 = vector.extract_strided_slice %17 {offsets = [0, 0], sizes = [4, 512], strides = [1, 1]} : vector<8x512xf32> to vector<4x512xf32>
    %19 = vector.extract_strided_slice %17 {offsets = [4, 0], sizes = [4, 512], strides = [1, 1]} : vector<8x512xf32> to vector<4x512xf32>
    %20 = arith.mulf %18, %19 : vector<4x512xf32>
    %21 = vector.extract_strided_slice %20 {offsets = [0, 0], sizes = [2, 512], strides = [1, 1]} : vector<4x512xf32> to vector<2x512xf32>
    %22 = vector.extract_strided_slice %20 {offsets = [2, 0], sizes = [2, 512], strides = [1, 1]} : vector<4x512xf32> to vector<2x512xf32>
    %23 = arith.mulf %21, %22 : vector<2x512xf32>
    %24 = vector.extract_strided_slice %23 {offsets = [0, 0], sizes = [1, 512], strides = [1, 1]} : vector<2x512xf32> to vector<1x512xf32>
    %25 = vector.extract_strided_slice %23 {offsets = [1, 0], sizes = [1, 512], strides = [1, 1]} : vector<2x512xf32> to vector<1x512xf32>
    %26 = arith.mulf %24, %25 : vector<1x512xf32>
    %c0_4 = arith.constant 0 : index
    %c0_5 = arith.constant 0 : index
    %27 = vector.load %arg2[%c0_4, %c0_5] : memref<512x8xf32, #tpu.memory_space<vmem>>, vector<512x8xf32>
    %28 = tpu.transpose %27, [1, 0] : vector<512x8xf32> -> vector<8x512xf32>
    %29 = vector.broadcast %2 : vector<8x1xf32> to vector<8x512xf32>
    %30 = arith.mulf %28, %29 : vector<8x512xf32>
    %31 = vector.broadcast %3 : vector<8x1xf32> to vector<8x512xf32>
    %32 = arith.addf %30, %31 : vector<8x512xf32>
    %33 = vector.broadcast %4 : vector<8x1xf32> to vector<8x512xf32>
    %34 = arith.mulf %32, %33 : vector<8x512xf32>
    %35 = vector.broadcast %5 : vector<8x1xf32> to vector<8x512xf32>
    %36 = arith.addf %34, %35 : vector<8x512xf32>
    %37 = arith.mulf %32, %32 : vector<8x512xf32>
    %38 = arith.mulf %36, %36 : vector<8x512xf32>
    %39 = arith.subf %37, %38 : vector<8x512xf32>
    %cst_6 = arith.constant 5.000000e-01 : f32
    %40 = vector.broadcast %cst_6 : f32 to vector<8x512xf32>
    %41 = arith.mulf %40, %39 : vector<8x512xf32>
    %42 = math.exp %41 : vector<8x512xf32>
    %43 = vector.broadcast %4 : vector<8x1xf32> to vector<8x512xf32>
    %44 = arith.mulf %42, %43 : vector<8x512xf32>
    %cst_7 = arith.constant 0.00999999977 : f32
    %45 = vector.broadcast %cst_7 : f32 to vector<8x512xf32>
    %46 = arith.maximumf %44, %45 : vector<8x512xf32>
    %47 = arith.cmpf one, %46, %46 : vector<8x512xf32>
    %cst_8 = arith.constant 0x7F800000 : f32
    %48 = vector.broadcast %cst_8 : f32 to vector<8x512xf32>
    %49 = arith.cmpf oeq, %46, %48 : vector<8x512xf32>
    %50 = arith.ori %47, %49 : vector<8x512xi1>
    %cst_9 = arith.constant 1.000000e+02 : f32
    %51 = vector.broadcast %cst_9 : f32 to vector<8x512xf32>
    %52 = arith.select %50, %51, %46 : vector<8x512xi1>, vector<8x512xf32>
    %53 = vector.extract_strided_slice %52 {offsets = [0, 0], sizes = [4, 512], strides = [1, 1]} : vector<8x512xf32> to vector<4x512xf32>
    %54 = vector.extract_strided_slice %52 {offsets = [4, 0], sizes = [4, 512], strides = [1, 1]} : vector<8x512xf32> to vector<4x512xf32>
    %55 = arith.mulf %53, %54 : vector<4x512xf32>
    %56 = vector.extract_strided_slice %55 {offsets = [0, 0], sizes = [2, 512], strides = [1, 1]} : vector<4x512xf32> to vector<2x512xf32>
    %57 = vector.extract_strided_slice %55 {offsets = [2, 0], sizes = [2, 512], strides = [1, 1]} : vector<4x512xf32> to vector<2x512xf32>
    %58 = arith.mulf %56, %57 : vector<2x512xf32>
    %59 = vector.extract_strided_slice %58 {offsets = [0, 0], sizes = [1, 512], strides = [1, 1]} : vector<2x512xf32> to vector<1x512xf32>
    %60 = vector.extract_strided_slice %58 {offsets = [1, 0], sizes = [1, 512], strides = [1, 1]} : vector<2x512xf32> to vector<1x512xf32>
    %61 = arith.mulf %59, %60 : vector<1x512xf32>
    %cst_10 = arith.constant 0.43359375 : f32
    %62 = vector.broadcast %cst_10 : f32 to vector<1x512xf32>
    %63 = arith.mulf %62, %61 : vector<1x512xf32>
    %64 = arith.mulf %63, %26 : vector<1x512xf32>
    %c0_11 = arith.constant 0 : index
    %c0_12 = arith.constant 0 : index
    %65 = vector.load %arg4[%c0_11, %c0_12] : memref<1x512xf32, #tpu.memory_space<vmem>>, vector<1x512xf32>
    tpu.vector_store %arg4[%c0_11, %c0_12], %64 {strides = array<i32>} : memref<1x512xf32, #tpu.memory_space<vmem>>, vector<1x512xf32>,
    return
  }
  func.func @transform_0(%arg0: i32) -> (i32, i32) {
    %c0_i32 = arith.constant 0 : i32
    %c0_i32_0 = arith.constant 0 : i32
    return %arg0, %c0_i32 : i32, i32
  }
  func.func @transform_1(%arg0: i32) -> (i32, i32) {
    %c0_i32 = arith.constant 0 : i32
    %c0_i32_0 = arith.constant 0 : i32
    return %arg0, %c0_i32 : i32, i32
  }
  func.func @transform_2(%arg0: i32) -> (i32, i32) {
    %c0_i32 = arith.constant 0 : i32
    %c0_i32_0 = arith.constant 0 : i32
    %c0_i32_1 = arith.constant 0 : i32
    return %c0_i32, %c0_i32_0 : i32, i32
  }
  func.func @transform_3(%arg0: i32) -> (i32, i32) {
    %c0_i32 = arith.constant 0 : i32
    %c0_i32_0 = arith.constant 0 : i32
    return %c0_i32, %arg0 : i32, i32
  }
}

</mosaic_0001>

<llo_original>
// kernel: tpu_custom_call.1
$region0: #{tpu_custom_call.1}
  #allocation0 [shape = 'u32[]', space=smem, size = 0x4, offset = 0x4, fixed_abs, tag = 'smem constant byte address 0x4 - core index']
  #allocation1 [shape = 'u32[144,128]{1,0:T(1,128)}', space=vmem, size = 0x12000, scoped, tag = 'internal scratch']
  %s0 = inlined_call_operand.vmem [shape: s8[512,16], index: 0, kind: input, shape index: {}]
  %s1 = inlined_call_operand.vmem [shape: f32[512,8], index: 1, kind: input, shape index: {}]
  %s2 = inlined_call_operand.vmem [shape: f32[48,1], index: 2, kind: input, shape index: {}]
  %s3 = inlined_call_operand.hbm [shape: f32[1,512], index: 3, kind: output, shape index: {}]
  %s4 = sld [smem:[#allocation0]]
  $region22: #{tpu_custom_call.1} parent=0
    _
  %s6 = ssub.s32 1, %s4
  %s7 = scalar_select 0, %s6, %s4
  $region1: #{tpu_custom_call.1} parent=0
    #allocation2 [shape = 'u8[2048]{0}', space=vmem, size = 0x800, scoped, tag = 'output window, operand 0, single buffered']
    #allocation3 [shape = 's32[1]{0}', space=sflag, size = 0x4, scoped, tag = 'scoped memory for tpu_custom_call.1']
    %8 = vsyncpa [#allocation3], 0
    // Predicated region
    $region2: #{tpu_custom_call.1} parent=1 // pred_check
      _
    $region3: #{tpu_custom_call.1} parent=1 // pred_check_branch
      %10 = sbr.rel (0) target = $region5
    $region4: #{tpu_custom_call.1} parent=1 // pred_region
      _
    $region5: #{tpu_custom_call.1} parent=1 // pred_fallthru
      _
    // Predicated region
    $region6: #{tpu_custom_call.1} parent=1 // pred_check
      _
    $region7: #{tpu_custom_call.1} parent=1 // pred_check_branch
      %12 = sbr.rel (0) target = $region9
    $region8: #{tpu_custom_call.1} parent=1 // pred_region
      _
    $region9: #{tpu_custom_call.1} parent=1 // pred_fallthru
      _
    // Predicated region
    $region10: #{tpu_custom_call.1} parent=1 // pred_check
      _
    $region11: #{tpu_custom_call.1} parent=1 // pred_check_branch
      %14 = sbr.rel (0) target = $region13
    $region12: #{tpu_custom_call.1} parent=1 // pred_region
      _
    $region13: #{tpu_custom_call.1} parent=1 // pred_fallthru
      _
    %v15 = vld [vmem:[%s2] sm:$0xff]
    %v16 = vld [vmem:[%s2 + $0x8] sm:$0xff]
    %v17 = vld [vmem:[%s2 + $0x10] sm:$0xff]
    %v18 = vld [vmem:[%s2 + $0x18] sm:$0xff]
    %v19 = vld [vmem:[%s2 + $0x20] sm:$0xff]
    %v20 = vld [vmem:[%s2 + $0x28] sm:$0xff]
    %v21 = vld [vmem:[%s0] sm:$0xff]
    %v22 = vld [vmem:[%s0 + $0x8] sm:$0xff]
    %v23 = vld [vmem:[%s0 + $0x10] sm:$0xff]
    %v24 = vld [vmem:[%s0 + $0x18] sm:$0xff]
    %v25 = vld [vmem:[%s0 + $0x20] sm:$0xff]
    %v26 = vld [vmem:[%s0 + $0x28] sm:$0xff]
    %v27 = vld [vmem:[%s0 + $0x30] sm:$0xff]
    %v28 = vld [vmem:[%s0 + $0x38] sm:$0xff]
    %v29 = vld [vmem:[%s0 + $0x40] sm:$0xff]
    %v30 = vld [vmem:[%s0 + $0x48] sm:$0xff]
    %v31 = vld [vmem:[%s0 + $0x50] sm:$0xff]
    %v32 = vld [vmem:[%s0 + $0x58] sm:$0xff]
    %v33 = vld [vmem:[%s0 + $0x60] sm:$0xff]
    %v34 = vld [vmem:[%s0 + $0x68] sm:$0xff]
    %v35 = vld [vmem:[%s0 + $0x70] sm:$0xff]
    %v36 = vld [vmem:[%s0 + $0x78] sm:$0xff]
    %v37 = vunpack.c.0.s8 %v21
    %v38 = vunpack.c.1.s8 %v21
    %v39 = vunpack.c.2.s8 %v21
    %v40 = vunpack.c.3.s8 %v21
    %v41 = vunpack.c.0.s8 %v22
    %v42 = vunpack.c.1.s8 %v22
    %v43 = vunpack.c.2.s8 %v22
    %v44 = vunpack.c.3.s8 %v22
    %v45 = vunpack.c.0.s8 %v23
    %v46 = vunpack.c.1.s8 %v23
    %v47 = vunpack.c.2.s8 %v23
    %v48 = vunpack.c.3.s8 %v23
    %v49 = vunpack.c.0.s8 %v24
    %v50 = vunpack.c.1.s8 %v24
    %v51 = vunpack.c.2.s8 %v24
    %v52 = vunpack.c.3.s8 %v24
    %v53 = vunpack.c.0.s8 %v25
    %v54 = vunpack.c.1.s8 %v25
    %v55 = vunpack.c.2.s8 %v25
    %v56 = vunpack.c.3.s8 %v25
    %v57 = vunpack.c.0.s8 %v26
    %v58 = vunpack.c.1.s8 %v26
    %v59 = vunpack.c.2.s8 %v26
    %v60 = vunpack.c.3.s8 %v26
    %v61 = vunpack.c.0.s8 %v27
    %v62 = vunpack.c.1.s8 %v27
    %v63 = vunpack.c.2.s8 %v27
    %v64 = vunpack.c.3.s8 %v27
    %v65 = vunpack.c.0.s8 %v28
    %v66 = vunpack.c.1.s8 %v28
    %v67 = vunpack.c.2.s8 %v28
    %v68 = vunpack.c.3.s8 %v28
    %v69 = vunpack.c.0.s8 %v29
    %v70 = vunpack.c.1.s8 %v29
    %v71 = vunpack.c.2.s8 %v29
    %v72 = vunpack.c.3.s8 %v29
    %v73 = vunpack.c.0.s8 %v30
    %v74 = vunpack.c.1.s8 %v30
    %v75 = vunpack.c.2.s8 %v30
    %v76 = vunpack.c.3.s8 %v30
    %v77 = vunpack.c.0.s8 %v31
    %v78 = vunpack.c.1.s8 %v31
    %v79 = vunpack.c.2.s8 %v31
    %v80 = vunpack.c.3.s8 %v31
    %v81 = vunpack.c.0.s8 %v32
    %v82 = vunpack.c.1.s8 %v32
    %v83 = vunpack.c.2.s8 %v32
    %v84 = vunpack.c.3.s8 %v32
    %v85 = vunpack.c.0.s8 %v33
    %v86 = vunpack.c.1.s8 %v33
    %v87 = vunpack.c.2.s8 %v33
    %v88 = vunpack.c.3.s8 %v33
    %v89 = vunpack.c.0.s8 %v34
    %v90 = vunpack.c.1.s8 %v34
    %v91 = vunpack.c.2.s8 %v34
    %v92 = vunpack.c.3.s8 %v34
    %v93 = vunpack.c.0.s8 %v35
    %v94 = vunpack.c.1.s8 %v35
    %v95 = vunpack.c.2.s8 %v35
    %v96 = vunpack.c.3.s8 %v35
    %v97 = vunpack.c.0.s8 %v36
    %v98 = vunpack.c.1.s8 %v36
    %v99 = vunpack.c.2.s8 %v36
    %v100 = vunpack.c.3.s8 %v36
    %v101 = vcvt.s32.f32 %v37
    %v102 = vcvt.s32.f32 %v38
    %v103 = vcvt.s32.f32 %v39
    %v104 = vcvt.s32.f32 %v40
    %v105 = vcvt.s32.f32 %v41
    %v106 = vcvt.s32.f32 %v42
    %v107 = vcvt.s32.f32 %v43
    %v108 = vcvt.s32.f32 %v44
    %v109 = vcvt.s32.f32 %v45
    %v110 = vcvt.s32.f32 %v46
    %v111 = vcvt.s32.f32 %v47
    %v112 = vcvt.s32.f32 %v48
    %v113 = vcvt.s32.f32 %v49
    %v114 = vcvt.s32.f32 %v50
    %v115 = vcvt.s32.f32 %v51
    %v116 = vcvt.s32.f32 %v52
    %v117 = vcvt.s32.f32 %v53
    %v118 = vcvt.s32.f32 %v54
    %v119 = vcvt.s32.f32 %v55
    %v120 = vcvt.s32.f32 %v56
    %v121 = vcvt.s32.f32 %v57
    %v122 = vcvt.s32.f32 %v58
    %v123 = vcvt.s32.f32 %v59
    %v124 = vcvt.s32.f32 %v60
    %v125 = vcvt.s32.f32 %v61
    %v126 = vcvt.s32.f32 %v62
    %v127 = vcvt.s32.f32 %v63
    %v128 = vcvt.s32.f32 %v64
    %v129 = vcvt.s32.f32 %v65
    %v130 = vcvt.s32.f32 %v66
    %v131 = vcvt.s32.f32 %v67
    %v132 = vcvt.s32.f32 %v68
    %v133 = vcvt.s32.f32 %v69
    %v134 = vcvt.s32.f32 %v70
    %v135 = vcvt.s32.f32 %v71
    %v136 = vcvt.s32.f32 %v72
    %v137 = vcvt.s32.f32 %v73
    %v138 = vcvt.s32.f32 %v74
    %v139 = vcvt.s32.f32 %v75
    %v140 = vcvt.s32.f32 %v76
    %v141 = vcvt.s32.f32 %v77
    %v142 = vcvt.s32.f32 %v78
    %v143 = vcvt.s32.f32 %v79
    %v144 = vcvt.s32.f32 %v80
    %v145 = vcvt.s32.f32 %v81
    %v146 = vcvt.s32.f32 %v82
    %v147 = vcvt.s32.f32 %v83
    %v148 = vcvt.s32.f32 %v84
    %v149 = vcvt.s32.f32 %v85
    %v150 = vcvt.s32.f32 %v86
    %v151 = vcvt.s32.f32 %v87
    %v152 = vcvt.s32.f32 %v88
    %v153 = vcvt.s32.f32 %v89
    %v154 = vcvt.s32.f32 %v90
    %v155 = vcvt.s32.f32 %v91
    %v156 = vcvt.s32.f32 %v92
    %v157 = vcvt.s32.f32 %v93
    %v158 = vcvt.s32.f32 %v94
    %v159 = vcvt.s32.f32 %v95
    %v160 = vcvt.s32.f32 %v96
    %v161 = vcvt.s32.f32 %v97
    %v162 = vcvt.s32.f32 %v98
    %v163 = vcvt.s32.f32 %v99
    %v164 = vcvt.s32.f32 %v100
    %165 = vxpose.xlu0.b32.start [1/16] %v101, 128
    %166 = vxpose.xlu0.b32.cont [2/16] %v102, 128
    %167 = vxpose.xlu0.b32.cont [3/16] %v103, 128
    %168 = vxpose.xlu0.b32.cont [4/16] %v104, 128
    %169 = vxpose.xlu0.b32.cont [5/16] %v105, 128
    %170 = vxpose.xlu0.b32.cont [6/16] %v106, 128
    %171 = vxpose.xlu0.b32.cont [7/16] %v107, 128
    %172 = vxpose.xlu0.b32.cont [8/16] %v108, 128
    %173 = vxpose.xlu0.b32.cont [9/16] %v109, 128
    %174 = vxpose.xlu0.b32.cont [10/16] %v110, 128
    %175 = vxpose.xlu0.b32.cont [11/16] %v111, 128
    %176 = vxpose.xlu0.b32.cont [12/16] %v112, 128
    %177 = vxpose.xlu0.b32.cont [13/16] %v113, 128
    %178 = vxpose.xlu0.b32.cont [14/16] %v114, 128
    %179 = vxpose.xlu0.b32.cont [15/16] %v115, 128
    %180 = vxpose.xlu0.b32.end [16/16] %v116, 128
    %v181 = vpop.trf.xlu0
    %v182 = vpop.trf.xlu0
    %v183 = vpop.trf.xlu0
    %v184 = vpop.trf.xlu0
    %v185 = vpop.trf.xlu0
    %v186 = vpop.trf.xlu0
    %v187 = vpop.trf.xlu0
    %v188 = vpop.trf.xlu0
    %v189 = vpop.trf.xlu0
    %v190 = vpop.trf.xlu0
    %v191 = vpop.trf.xlu0
    %v192 = vpop.trf.xlu0
    %v193 = vpop.trf.xlu0
    %v194 = vpop.trf.xlu0
    %v195 = vpop.trf.xlu0
    %v196 = vpop.trf.xlu0
    %197 = vxpose.xlu0.b32.start [1/16] %v117, 128
    %198 = vxpose.xlu0.b32.cont [2/16] %v118, 128
    %199 = vxpose.xlu0.b32.cont [3/16] %v119, 128
    %200 = vxpose.xlu0.b32.cont [4/16] %v120, 128
    %201 = vxpose.xlu0.b32.cont [5/16] %v121, 128
    %202 = vxpose.xlu0.b32.cont [6/16] %v122, 128
    %203 = vxpose.xlu0.b32.cont [7/16] %v123, 128
    %204 = vxpose.xlu0.b32.cont [8/16] %v124, 128
    %205 = vxpose.xlu0.b32.cont [9/16] %v125, 128
    %206 = vxpose.xlu0.b32.cont [10/16] %v126, 128
    %207 = vxpose.xlu0.b32.cont [11/16] %v127, 128
    %208 = vxpose.xlu0.b32.cont [12/16] %v128, 128
    %209 = vxpose.xlu0.b32.cont [13/16] %v129, 128
    %210 = vxpose.xlu0.b32.cont [14/16] %v130, 128
    %211 = vxpose.xlu0.b32.cont [15/16] %v131, 128
    %212 = vxpose.xlu0.b32.end [16/16] %v132, 128
    %v213 = vpop.trf.xlu0
    %v214 = vpop.trf.xlu0
    %v215 = vpop.trf.xlu0
    %v216 = vpop.trf.xlu0
    %v217 = vpop.trf.xlu0
    %v218 = vpop.trf.xlu0
    %v219 = vpop.trf.xlu0
    %v220 = vpop.trf.xlu0
    %v221 = vpop.trf.xlu0
    %v222 = vpop.trf.xlu0
    %v223 = vpop.trf.xlu0
    %v224 = vpop.trf.xlu0
    %v225 = vpop.trf.xlu0
    %v226 = vpop.trf.xlu0
    %v227 = vpop.trf.xlu0
    %v228 = vpop.trf.xlu0
    %229 = vxpose.xlu0.b32.start [1/16] %v133, 128
    %230 = vxpose.xlu0.b32.cont [2/16] %v134, 128
    %231 = vxpose.xlu0.b32.cont [3/16] %v135, 128
    %232 = vxpose.xlu0.b32.cont [4/16] %v136, 128
    %233 = vxpose.xlu0.b32.cont [5/16] %v137, 128
    %234 = vxpose.xlu0.b32.cont [6/16] %v138, 128
    %235 = vxpose.xlu0.b32.cont [7/16] %v139, 128
    %236 = vxpose.xlu0.b32.cont [8/16] %v140, 128
    %237 = vxpose.xlu0.b32.cont [9/16] %v141, 128
    %238 = vxpose.xlu0.b32.cont [10/16] %v142, 128
    %239 = vxpose.xlu0.b32.cont [11/16] %v143, 128
    %240 = vxpose.xlu0.b32.cont [12/16] %v144, 128
    %241 = vxpose.xlu0.b32.cont [13/16] %v145, 128
    %242 = vxpose.xlu0.b32.cont [14/16] %v146, 128
    %243 = vxpose.xlu0.b32.cont [15/16] %v147, 128
    %244 = vxpose.xlu0.b32.end [16/16] %v148, 128
    %v245 = vpop.trf.xlu0
    %v246 = vpop.trf.xlu0
    %v247 = vpop.trf.xlu0
    %v248 = vpop.trf.xlu0
    %v249 = vpop.trf.xlu0
    %v250 = vpop.trf.xlu0
    %v251 = vpop.trf.xlu0
    %v252 = vpop.trf.xlu0
    %v253 = vpop.trf.xlu0
    %v254 = vpop.trf.xlu0
    %v255 = vpop.trf.xlu0
    %v256 = vpop.trf.xlu0
    %v257 = vpop.trf.xlu0
    %v258 = vpop.trf.xlu0
    %v259 = vpop.trf.xlu0
    %v260 = vpop.trf.xlu0
    %261 = vxpose.xlu0.b32.start [1/16] %v149, 128
    %262 = vxpose.xlu0.b32.cont [2/16] %v150, 128
    %263 = vxpose.xlu0.b32.cont [3/16] %v151, 128
    %264 = vxpose.xlu0.b32.cont [4/16] %v152, 128
    %265 = vxpose.xlu0.b32.cont [5/16] %v153, 128
    %266 = vxpose.xlu0.b32.cont [6/16] %v154, 128
    %267 = vxpose.xlu0.b32.cont [7/16] %v155, 128
    %268 = vxpose.xlu0.b32.cont [8/16] %v156, 128
    %269 = vxpose.xlu0.b32.cont [9/16] %v157, 128
    %270 = vxpose.xlu0.b32.cont [10/16] %v158, 128
    %271 = vxpose.xlu0.b32.cont [11/16] %v159, 128
    %272 = vxpose.xlu0.b32.cont [12/16] %v160, 128
    %273 = vxpose.xlu0.b32.cont [13/16] %v161, 128
    %274 = vxpose.xlu0.b32.cont [14/16] %v162, 128
    %275 = vxpose.xlu0.b32.cont [15/16] %v163, 128
    %276 = vxpose.xlu0.b32.end [16/16] %v164, 128
    %v277 = vpop.trf.xlu0
    %v278 = vpop.trf.xlu0
    %v279 = vpop.trf.xlu0
    %v280 = vpop.trf.xlu0
    %v281 = vpop.trf.xlu0
    %v282 = vpop.trf.xlu0
    %v283 = vpop.trf.xlu0
    %v284 = vpop.trf.xlu0
    %v285 = vpop.trf.xlu0
    %v286 = vpop.trf.xlu0
    %v287 = vpop.trf.xlu0
    %v288 = vpop.trf.xlu0
    %v289 = vpop.trf.xlu0
    %v290 = vpop.trf.xlu0
    %v291 = vpop.trf.xlu0
    %v292 = vpop.trf.xlu0
    %vm293 = vcmp.eq.f32.partialorder %v181, 0.0
    %vm294 = vcmp.eq.f32.partialorder %v213, 0.0
    %vm295 = vcmp.eq.f32.partialorder %v245, 0.0
    %vm296 = vcmp.eq.f32.partialorder %v277, 0.0
    %vm297 = vcmp.eq.f32.partialorder %v182, 0.0
    %vm298 = vcmp.eq.f32.partialorder %v214, 0.0
    %vm299 = vcmp.eq.f32.partialorder %v246, 0.0
    %vm300 = vcmp.eq.f32.partialorder %v278, 0.0
    %302 = vset.pattern.permute.xlu0 0
    %303 = vperm.xlu0 %302, %v15
    %v304 = vpop.permute.xlu0 %303
    %307 = vset.pattern.permute.xlu0 0
    %308 = vperm.xlu0 %307, %v16
    %v309 = vpop.permute.xlu0 %308
    %v311 = vsel %vm293, 1.0, %v304
    %v312 = vsel %vm294, 1.0, %v304
    %v313 = vsel %vm295, 1.0, %v304
    %v314 = vsel %vm296, 1.0, %v304
    %v315 = vsel %vm297, 1.0, %v309
    %v316 = vsel %vm298, 1.0, %v309
    %v317 = vsel %vm299, 1.0, %v309
    %v318 = vsel %vm300, 1.0, %v309
    %v319 = vmul.f32 %v311, %v315
    %v320 = vmul.f32 %v312, %v316
    %v321 = vmul.f32 %v313, %v317
    %v322 = vmul.f32 %v314, %v318
    %v327 = vrot.slane %v319, 4
    %v328 = vrot.slane %v320, 4
    %v329 = vrot.slane %v321, 4
    %v330 = vrot.slane %v322, 4
    %v335 = vmul.f32 %v319, %v327
    %v336 = vmul.f32 %v320, %v328
    %v337 = vmul.f32 %v321, %v329
    %v338 = vmul.f32 %v322, %v330
    %v343 = vrot.slane %v335, 2
    %v344 = vrot.slane %v336, 2
    %v345 = vrot.slane %v337, 2
    %v346 = vrot.slane %v338, 2
    %v351 = vmul.f32 %v335, %v343
    %v352 = vmul.f32 %v336, %v344
    %v353 = vmul.f32 %v337, %v345
    %v354 = vmul.f32 %v338, %v346
    %v359 = vrot.slane %v351, 1
    %v360 = vrot.slane %v352, 1
    %v361 = vrot.slane %v353, 1
    %v362 = vrot.slane %v354, 1
    %v367 = vmul.f32 %v351, %v359
    %v368 = vmul.f32 %v352, %v360
    %v369 = vmul.f32 %v353, %v361
    %v370 = vmul.f32 %v354, %v362
    %v371 = vld [vmem:[%s1] sm:$0xff]
    %v372 = vld [vmem:[%s1 + $0x8] sm:$0xff]
    %v373 = vld [vmem:[%s1 + $0x10] sm:$0xff]
    %v374 = vld [vmem:[%s1 + $0x18] sm:$0xff]
    %v375 = vld [vmem:[%s1 + $0x20] sm:$0xff]
    %v376 = vld [vmem:[%s1 + $0x28] sm:$0xff]
    %v377 = vld [vmem:[%s1 + $0x30] sm:$0xff]
    %v378 = vld [vmem:[%s1 + $0x38] sm:$0xff]
    %v379 = vld [vmem:[%s1 + $0x40] sm:$0xff]
    %v380 = vld [vmem:[%s1 + $0x48] sm:$0xff]
    %v381 = vld [vmem:[%s1 + $0x50] sm:$0xff]
    %v382 = vld [vmem:[%s1 + $0x58] sm:$0xff]
    %v383 = vld [vmem:[%s1 + $0x60] sm:$0xff]
    %v384 = vld [vmem:[%s1 + $0x68] sm:$0xff]
    %v385 = vld [vmem:[%s1 + $0x70] sm:$0xff]
    %v386 = vld [vmem:[%s1 + $0x78] sm:$0xff]
    %v387 = vld [vmem:[%s1 + $0x80] sm:$0xff]
    %v388 = vld [vmem:[%s1 + $0x88] sm:$0xff]
    %v389 = vld [vmem:[%s1 + $0x90] sm:$0xff]
    %v390 = vld [vmem:[%s1 + $0x98] sm:$0xff]
    %v391 = vld [vmem:[%s1 + $0xa0] sm:$0xff]
    %v392 = vld [vmem:[%s1 + $0xa8] sm:$0xff]
    %v393 = vld [vmem:[%s1 + $0xb0] sm:$0xff]
    %v394 = vld [vmem:[%s1 + $0xb8] sm:$0xff]
    %v395 = vld [vmem:[%s1 + $0xc0] sm:$0xff]
    %v396 = vld [vmem:[%s1 + $0xc8] sm:$0xff]
    %v397 = vld [vmem:[%s1 + $0xd0] sm:$0xff]
    %v398 = vld [vmem:[%s1 + $0xd8] sm:$0xff]
    %v399 = vld [vmem:[%s1 + $0xe0] sm:$0xff]
    %v400 = vld [vmem:[%s1 + $0xe8] sm:$0xff]
    %v401 = vld [vmem:[%s1 + $0xf0] sm:$0xff]
    %v402 = vld [vmem:[%s1 + $0xf8] sm:$0xff]
    %v403 = vld [vmem:[%s1 + $0x100] sm:$0xff]
    %v404 = vld [vmem:[%s1 + $0x108] sm:$0xff]
    %v405 = vld [vmem:[%s1 + $0x110] sm:$0xff]
    %v406 = vld [vmem:[%s1 + $0x118] sm:$0xff]
    %v407 = vld [vmem:[%s1 + $0x120] sm:$0xff]
    %v408 = vld [vmem:[%s1 + $0x128] sm:$0xff]
    %v409 = vld [vmem:[%s1 + $0x130] sm:$0xff]
    %v410 = vld [vmem:[%s1 + $0x138] sm:$0xff]
    %v411 = vld [vmem:[%s1 + $0x140] sm:$0xff]
    %v412 = vld [vmem:[%s1 + $0x148] sm:$0xff]
    %v413 = vld [vmem:[%s1 + $0x150] sm:$0xff]
    %v414 = vld [vmem:[%s1 + $0x158] sm:$0xff]
    %v415 = vld [vmem:[%s1 + $0x160] sm:$0xff]
    %v416 = vld [vmem:[%s1 + $0x168] sm:$0xff]
    %v417 = vld [vmem:[%s1 + $0x170] sm:$0xff]
    %v418 = vld [vmem:[%s1 + $0x178] sm:$0xff]
    %v419 = vld [vmem:[%s1 + $0x180] sm:$0xff]
    %v420 = vld [vmem:[%s1 + $0x188] sm:$0xff]
    %v421 = vld [vmem:[%s1 + $0x190] sm:$0xff]
    %v422 = vld [vmem:[%s1 + $0x198] sm:$0xff]
    %v423 = vld [vmem:[%s1 + $0x1a0] sm:$0xff]
    %v424 = vld [vmem:[%s1 + $0x1a8] sm:$0xff]
    %v425 = vld [vmem:[%s1 + $0x1b0] sm:$0xff]
    %v426 = vld [vmem:[%s1 + $0x1b8] sm:$0xff]
    %v427 = vld [vmem:[%s1 + $0x1c0] sm:$0xff]
    %v428 = vld [vmem:[%s1 + $0x1c8] sm:$0xff]
    %v429 = vld [vmem:[%s1 + $0x1d0] sm:$0xff]
    %v430 = vld [vmem:[%s1 + $0x1d8] sm:$0xff]
    %v431 = vld [vmem:[%s1 + $0x1e0] sm:$0xff]
    %v432 = vld [vmem:[%s1 + $0x1e8] sm:$0xff]
    %v433 = vld [vmem:[%s1 + $0x1f0] sm:$0xff]
    %v434 = vld [vmem:[%s1 + $0x1f8] sm:$0xff]
    %435 = vxpose.xlu0.b32.start [1/16] %v371, 128
    %436 = vxpose.xlu0.b32.cont [2/16] %v372, 128
    %437 = vxpose.xlu0.b32.cont [3/16] %v373, 128
    %438 = vxpose.xlu0.b32.cont [4/16] %v374, 128
    %439 = vxpose.xlu0.b32.cont [5/16] %v375, 128
    %440 = vxpose.xlu0.b32.cont [6/16] %v376, 128
    %441 = vxpose.xlu0.b32.cont [7/16] %v377, 128
    %442 = vxpose.xlu0.b32.cont [8/16] %v378, 128
    %443 = vxpose.xlu0.b32.cont [9/16] %v379, 128
    %444 = vxpose.xlu0.b32.cont [10/16] %v380, 128
    %445 = vxpose.xlu0.b32.cont [11/16] %v381, 128
    %446 = vxpose.xlu0.b32.cont [12/16] %v382, 128
    %447 = vxpose.xlu0.b32.cont [13/16] %v383, 128
    %448 = vxpose.xlu0.b32.cont [14/16] %v384, 128
    %449 = vxpose.xlu0.b32.cont [15/16] %v385, 128
    %450 = vxpose.xlu0.b32.end [16/16] %v386, 128
    %v451 = vpop.trf.xlu0
    %v452 = vpop.trf.xlu0
    %v453 = vpop.trf.xlu0
    %v454 = vpop.trf.xlu0
    %v455 = vpop.trf.xlu0
    %v456 = vpop.trf.xlu0
    %v457 = vpop.trf.xlu0
    %v458 = vpop.trf.xlu0
    %v459 = vpop.trf.xlu0
    %v460 = vpop.trf.xlu0
    %v461 = vpop.trf.xlu0
    %v462 = vpop.trf.xlu0
    %v463 = vpop.trf.xlu0
    %v464 = vpop.trf.xlu0
    %v465 = vpop.trf.xlu0
    %v466 = vpop.trf.xlu0
    %467 = vxpose.xlu0.b32.start [1/16] %v387, 128
    %468 = vxpose.xlu0.b32.cont [2/16] %v388, 128
    %469 = vxpose.xlu0.b32.cont [3/16] %v389, 128
    %470 = vxpose.xlu0.b32.cont [4/16] %v390, 128
    %471 = vxpose.xlu0.b32.cont [5/16] %v391, 128
    %472 = vxpose.xlu0.b32.cont [6/16] %v392, 128
    %473 = vxpose.xlu0.b32.cont [7/16] %v393, 128
    %474 = vxpose.xlu0.b32.cont [8/16] %v394, 128
    %475 = vxpose.xlu0.b32.cont [9/16] %v395, 128
    %476 = vxpose.xlu0.b32.cont [10/16] %v396, 128
    %477 = vxpose.xlu0.b32.cont [11/16] %v397, 128
    %478 = vxpose.xlu0.b32.cont [12/16] %v398, 128
    %479 = vxpose.xlu0.b32.cont [13/16] %v399, 128
    %480 = vxpose.xlu0.b32.cont [14/16] %v400, 128
    %481 = vxpose.xlu0.b32.cont [15/16] %v401, 128
    %482 = vxpose.xlu0.b32.end [16/16] %v402, 128
    %v483 = vpop.trf.xlu0
    %v484 = vpop.trf.xlu0
    %v485 = vpop.trf.xlu0
    %v486 = vpop.trf.xlu0
    %v487 = vpop.trf.xlu0
    %v488 = vpop.trf.xlu0
    %v489 = vpop.trf.xlu0
    %v490 = vpop.trf.xlu0
    %v491 = vpop.trf.xlu0
    %v492 = vpop.trf.xlu0
    %v493 = vpop.trf.xlu0
    %v494 = vpop.trf.xlu0
    %v495 = vpop.trf.xlu0
    %v496 = vpop.trf.xlu0
    %v497 = vpop.trf.xlu0
    %v498 = vpop.trf.xlu0
    %499 = vxpose.xlu0.b32.start [1/16] %v403, 128
    %500 = vxpose.xlu0.b32.cont [2/16] %v404, 128
    %501 = vxpose.xlu0.b32.cont [3/16] %v405, 128
    %502 = vxpose.xlu0.b32.cont [4/16] %v406, 128
    %503 = vxpose.xlu0.b32.cont [5/16] %v407, 128
    %504 = vxpose.xlu0.b32.cont [6/16] %v408, 128
    %505 = vxpose.xlu0.b32.cont [7/16] %v409, 128
    %506 = vxpose.xlu0.b32.cont [8/16] %v410, 128
    %507 = vxpose.xlu0.b32.cont [9/16] %v411, 128
    %508 = vxpose.xlu0.b32.cont [10/16] %v412, 128
    %509 = vxpose.xlu0.b32.cont [11/16] %v413, 128
    %510 = vxpose.xlu0.b32.cont [12/16] %v414, 128
    %511 = vxpose.xlu0.b32.cont [13/16] %v415, 128
    %512 = vxpose.xlu0.b32.cont [14/16] %v416, 128
    %513 = vxpose.xlu0.b32.cont [15/16] %v417, 128
    %514 = vxpose.xlu0.b32.end [16/16] %v418, 128
    %v515 = vpop.trf.xlu0
    %v516 = vpop.trf.xlu0
    %v517 = vpop.trf.xlu0
    %v518 = vpop.trf.xlu0
    %v519 = vpop.trf.xlu0
    %v520 = vpop.trf.xlu0
    %v521 = vpop.trf.xlu0
    %v522 = vpop.trf.xlu0
    %v523 = vpop.trf.xlu0
    %v524 = vpop.trf.xlu0
    %v525 = vpop.trf.xlu0
    %v526 = vpop.trf.xlu0
    %v527 = vpop.trf.xlu0
    %v528 = vpop.trf.xlu0
    %v529 = vpop.trf.xlu0
    %v530 = vpop.trf.xlu0
    %531 = vxpose.xlu0.b32.start [1/16] %v419, 128
    %532 = vxpose.xlu0.b32.cont [2/16] %v420, 128
    %533 = vxpose.xlu0.b32.cont [3/16] %v421, 128
    %534 = vxpose.xlu0.b32.cont [4/16] %v422, 128
    %535 = vxpose.xlu0.b32.cont [5/16] %v423, 128
    %536 = vxpose.xlu0.b32.cont [6/16] %v424, 128
    %537 = vxpose.xlu0.b32.cont [7/16] %v425, 128
    %538 = vxpose.xlu0.b32.cont [8/16] %v426, 128
    %539 = vxpose.xlu0.b32.cont [9/16] %v427, 128
    %540 = vxpose.xlu0.b32.cont [10/16] %v428, 128
    %541 = vxpose.xlu0.b32.cont [11/16] %v429, 128
    %542 = vxpose.xlu0.b32.cont [12/16] %v430, 128
    %543 = vxpose.xlu0.b32.cont [13/16] %v431, 128
    %544 = vxpose.xlu0.b32.cont [14/16] %v432, 128
    %545 = vxpose.xlu0.b32.cont [15/16] %v433, 128
    %546 = vxpose.xlu0.b32.end [16/16] %v434, 128
    %v547 = vpop.trf.xlu0
    %v548 = vpop.trf.xlu0
    %v549 = vpop.trf.xlu0
    %v550 = vpop.trf.xlu0
    %v551 = vpop.trf.xlu0
    %v552 = vpop.trf.xlu0
    %v553 = vpop.trf.xlu0
    %v554 = vpop.trf.xlu0
    %v555 = vpop.trf.xlu0
    %v556 = vpop.trf.xlu0
    %v557 = vpop.trf.xlu0
    %v558 = vpop.trf.xlu0
    %v559 = vpop.trf.xlu0
    %v560 = vpop.trf.xlu0
    %v561 = vpop.trf.xlu0
    %v562 = vpop.trf.xlu0
    %564 = vset.pattern.permute.xlu0 0
    %565 = vperm.xlu0 %564, %v17
    %v566 = vpop.permute.xlu0 %565
    %v568 = vmul.f32 %v451, %v566
    %v569 = vmul.f32 %v483, %v566
    %v570 = vmul.f32 %v515, %v566
    %v571 = vmul.f32 %v547, %v566
    %573 = vset.pattern.permute.xlu0 0
    %574 = vperm.xlu0 %573, %v18
    %v575 = vpop.permute.xlu0 %574
    %v577 = vadd.f32 %v568, %v575
    %v578 = vadd.f32 %v569, %v575
    %v579 = vadd.f32 %v570, %v575
    %v580 = vadd.f32 %v571, %v575
    %582 = vset.pattern.permute.xlu0 0
    %583 = vperm.xlu0 %582, %v19
    %v584 = vpop.permute.xlu0 %583
    %v586 = vmul.f32 %v577, %v584
    %v587 = vmul.f32 %v578, %v584
    %v588 = vmul.f32 %v579, %v584
    %v589 = vmul.f32 %v580, %v584
    %591 = vset.pattern.permute.xlu0 0
    %592 = vperm.xlu0 %591, %v20
    %v593 = vpop.permute.xlu0 %592
    %v595 = vadd.f32 %v586, %v593
    %v596 = vadd.f32 %v587, %v593
    %v597 = vadd.f32 %v588, %v593
    %v598 = vadd.f32 %v589, %v593
    %v599 = vmul.f32 %v577, %v577
    %v600 = vmul.f32 %v578, %v578
    %v601 = vmul.f32 %v579, %v579
    %v602 = vmul.f32 %v580, %v580
    %v603 = vmul.f32 %v595, %v595
    %v604 = vmul.f32 %v596, %v596
    %v605 = vmul.f32 %v597, %v597
    %v606 = vmul.f32 %v598, %v598
    %v607 = vsub.f32 %v599, %v603
    %v608 = vsub.f32 %v600, %v604
    %v609 = vsub.f32 %v601, %v605
    %v610 = vsub.f32 %v602, %v606
    %v611 = vmul.f32 %v607, 0.5
    %v612 = vmul.f32 %v608, 0.5
    %v613 = vmul.f32 %v609, 0.5
    %v614 = vmul.f32 %v610, 0.5
    %v615 = vmul.f32 %v611, 1.442695
    %v616 = vpow.pop %v615
    %v617 = vmul.f32 %v612, 1.442695
    %v618 = vpow.pop %v617
    %v619 = vmul.f32 %v613, 1.442695
    %v620 = vpow.pop %v619
    %v621 = vmul.f32 %v614, 1.442695
    %v622 = vpow.pop %v621
    %v623 = vmul.f32 %v616, %v584
    %v624 = vmul.f32 %v618, %v584
    %v625 = vmul.f32 %v620, %v584
    %v626 = vmul.f32 %v622, %v584
    %v627 = vmax.f32 %v623, 0.01
    %v628 = vmax.f32 %v624, 0.01
    %v629 = vmax.f32 %v625, 0.01
    %v630 = vmax.f32 %v626, 0.01
    %vm631 = vcmp.ne.f32.partialorder %v627, %v627
    %vm632 = vcmp.ne.f32.partialorder %v628, %v628
    %vm633 = vcmp.ne.f32.partialorder %v629, %v629
    %vm634 = vcmp.ne.f32.partialorder %v630, %v630
    %vm635 = vcmp.eq.f32.partialorder %v627, inf
    %vm636 = vcmp.eq.f32.partialorder %v628, inf
    %vm637 = vcmp.eq.f32.partialorder %v629, inf
    %vm638 = vcmp.eq.f32.partialorder %v630, inf
    %vm639 = vmor %vm631, %vm635
    %vm640 = vmor %vm632, %vm636
    %vm641 = vmor %vm633, %vm637
    %vm642 = vmor %vm634, %vm638
    %v643 = vsel %vm639, 100.0, %v627
    %v644 = vsel %vm640, 100.0, %v628
    %v645 = vsel %vm641, 100.0, %v629
    %v646 = vsel %vm642, 100.0, %v630
    %v651 = vrot.slane %v643, 4
    %v652 = vrot.slane %v644, 4
    %v653 = vrot.slane %v645, 4
    %v654 = vrot.slane %v646, 4
    %v659 = vmul.f32 %v643, %v651
    %v660 = vmul.f32 %v644, %v652
    %v661 = vmul.f32 %v645, %v653
    %v662 = vmul.f32 %v646, %v654
    %v667 = vrot.slane %v659, 2
    %v668 = vrot.slane %v660, 2
    %v669 = vrot.slane %v661, 2
    %v670 = vrot.slane %v662, 2
    %v675 = vmul.f32 %v659, %v667
    %v676 = vmul.f32 %v660, %v668
    %v677 = vmul.f32 %v661, %v669
    %v678 = vmul.f32 %v662, %v670
    %v683 = vrot.slane %v675, 1
    %v684 = vrot.slane %v676, 1
    %v685 = vrot.slane %v677, 1
    %v686 = vrot.slane %v678, 1
    %v691 = vmul.f32 %v675, %v683
    %v692 = vmul.f32 %v676, %v684
    %v693 = vmul.f32 %v677, %v685
    %v694 = vmul.f32 %v678, %v686
    %v695 = vmul.f32 %v691, 0.43359375
    %v696 = vmul.f32 %v692, 0.43359375
    %v697 = vmul.f32 %v693, 0.43359375
    %v698 = vmul.f32 %v694, 0.43359375
    %v699 = vmul.f32 %v695, %v367
    %v700 = vmul.f32 %v696, %v368
    %v701 = vmul.f32 %v697, %v369
    %v702 = vmul.f32 %v698, %v370
    %v707 = vcombine.low %v699, %v700
    %v708 = vcombine.low %v701, %v702
    %v710 = vunpack.c.l.s4 1966171168
    %v711 = vunpack.c.0.s8 %v710
    %v712 = vlaneseq
    %v713 = vshrl.u32 %v712, 7
    %v714 = vsub.s32 %v711, %v713
    %v715 = vrot.slane %v707, %v714
    %v717 = vunpack.c.l.s4 1966171168
    %v718 = vunpack.c.0.s8 %v717
    %v719 = vlaneseq
    %v720 = vshrl.u32 %v719, 7
    %v721 = vsub.s32 %v718, %v720
    %v722 = vrot.slane %v708, %v721
    %v723 = vcombine.low %v715, %v722
    %v725 = vunpack.c.l.s4 1966171168
    %v726 = vunpack.c.0.s8 %v725
    %v727 = vlaneseq
    %v728 = vshrl.u32 %v727, 7
    %v729 = vsub.s32 %v726, %v728
    %v730 = vrot.slane %v723, %v729
    %v732 = vlaneseq
    %vm733 = vcmp.ge.s32.totalorder %v732, 0
    %vm734 = vcmp.lt.s32.totalorder %v732, 512
    %vm735 = vmand %vm733, %vm734
    %736 = vst.msk [vmem:[#allocation2] sm:$0xf] %vm735, %v730
    // Predicated region
    $region14: #{tpu_custom_call.1} parent=1 // pred_check
      _
    $region15: #{tpu_custom_call.1} parent=1 // pred_check_branch
      %738 = sbr.rel (0) target = $region17
    $region16: #{tpu_custom_call.1} parent=1 // pred_region
      %s740 = ssub.s32 64, 64
      %741 = vsyncadd [#allocation3], %s740
      %s743 = sshll.u32 [#allocation2], 4
      %s744 = int_to_ptr.vmem [resolvable:$true] %s743
      %746 = dma.vmem_to_hbm [thread:$0]  %s744, 64, %s3, [#allocation3]
    $region17: #{tpu_custom_call.1} parent=1 // pred_fallthru
      _
    // Predicated region
    $region18: #{tpu_custom_call.1} parent=1 // pred_check
      _
    $region19: #{tpu_custom_call.1} parent=1 // pred_check_branch
      %748 = sbr.rel (0) target = $region21
    $region20: #{tpu_custom_call.1} parent=1 // pred_region
      %749 = dma.done [#allocation3], 64
    $region21: #{tpu_custom_call.1} parent=1 // pred_fallthru
      _
    %750 = vsyncpa [#allocation3], 1

</llo_original>
